<compile_context>
chip_gen: v7x
topology: tpu7x:2x2x1
jax: 0.10.0
libtpu: 0.0.40
codegen_flags: <defaults>
</compile_context>

<pallas_src>
import jax
import jax.numpy as jnp
from jax.experimental import pallas as pl
from jax.experimental.pallas import tpu as pltpu


def _make_hbm_copy_kernel(chunks, inflight):
    """Build a kernel that copies x_hbm -> o_hbm chunk-by-chunk along axis 0.

    chunks:   list of (start, size) pairs along axis 0 (all Python-static, last
              chunk explicitly clamped — no OOB access of any kind).
    inflight: number of DMAs kept outstanding (round-robin semaphore slots).
    """

    def kernel(x_hbm, o_hbm, sems):
        copies = []
        for idx, (start, size) in enumerate(chunks):
            slot = idx % inflight
            if idx >= inflight:
                # The previous copy on this semaphore slot must finish before
                # the slot is reused.
                copies[idx - inflight].wait()
            cp = pltpu.make_async_copy(
                x_hbm.at[pl.ds(start, size)],
                o_hbm.at[pl.ds(start, size)],
                sems.at[slot],
            )
            cp.start()
            copies.append(cp)
        # Drain the copies that are still outstanding.
        for cp in copies[max(0, len(copies) - inflight):]:
            cp.wait()

    return kernel


def fp_encoder_forward(x_flat: jax.Array, num_graphs: int, fp_dim: int, *,
                       materialize: bool = False,
                       chunk_bytes: int = 4 * 1024 * 1024,
                       max_inflight: int = 4,
                       max_chunks: int = 32) -> jax.Array:
    """Pallas implementation of FPEncoder.forward.

    x_flat: flat fingerprint tensor of shape (num_graphs * fp_dim,)
    returns: (num_graphs, fp_dim) array with the same values as x_flat.

    materialize=False (default, production path): pure metadata reshape —
      zero HBM traffic, identical semantics to the PyTorch module.
    materialize=True: produce a distinct HBM buffer via a direct HBM->HBM
      DMA copy inside a Pallas kernel.
    """
    total = num_graphs * fp_dim
    assert x_flat.size == total

    if not materialize:
        # FPEncoder.forward is a pure reshape -> zero-cost metadata op in XLA.
        return x_flat.reshape(num_graphs, fp_dim)

    itemsize = jnp.dtype(x_flat.dtype).itemsize

    # Pick the slab shape the DMA operates on. The DMA never touches vregs, so
    # the (8,128) rule does not constrain it, but a lane-dense 2-D slab is the
    # most conservative / best-aligned layout when one is available.
    if fp_dim % 128 == 0:
        slab = x_flat.reshape(num_graphs, fp_dim)
        row_bytes = fp_dim * itemsize
    elif total % 128 == 0:
        slab = x_flat.reshape(total // 128, 128)
        row_bytes = 128 * itemsize
    else:
        # Odd sizes: copy the flat 1-D buffer directly (still a contiguous DMA).
        slab = x_flat.reshape(total)
        row_bytes = itemsize

    n0 = slab.shape[0]

    # ~chunk_bytes per DMA, last chunk clamped; cap the number of chunks so the
    # unrolled descriptor chain stays short for very large inputs.
    rows_per_chunk = max(1, chunk_bytes // row_bytes)
    rows_per_chunk = max(rows_per_chunk, -(-n0 // max_chunks))  # ceil division
    chunks = []
    start = 0
    while start < n0:
        size = min(rows_per_chunk, n0 - start)
        chunks.append((start, size))
        start += size
    inflight = max(1, min(max_inflight, len(chunks)))

    kernel = _make_hbm_copy_kernel(chunks, inflight)

    out_slab = pl.pallas_call(
        kernel,
        out_shape=jax.ShapeDtypeStruct(slab.shape, slab.dtype),
        in_specs=[pl.BlockSpec(memory_space=pl.ANY)],
        out_specs=pl.BlockSpec(memory_space=pl.ANY),
        scratch_shapes=[pltpu.SemaphoreType.DMA((inflight,))],
        cost_estimate=pl.CostEstimate(
            flops=0, transcendentals=0, bytes_accessed=2 * total * itemsize),
    )(slab)

    # Free metadata reshape back to the module's output shape.
    return out_slab.reshape(num_graphs, fp_dim)


if __name__ == "__main__":
    # Small, deterministic example consistent with the module:
    # num_graphs graphs, each with an fp_dim-dimensional fingerprint.
    num_graphs = 8
    fp_dim = 256  # args.fp_dim

    key = jax.random.PRNGKey(0)
    # data.x arrives flattened as (num_graphs * fp_dim,)
    x_flat = jax.random.normal(key, (num_graphs * fp_dim,), dtype=jnp.float32)

    # Reference semantics (pure reshape) — computed before the kernel call.
    ref = x_flat.reshape(num_graphs, fp_dim)

    # Production path: zero-cost metadata reshape (no kernel, no HBM traffic).
    out_view = fp_encoder_forward(x_flat, num_graphs, fp_dim, materialize=False)
    out_view = jax.block_until_ready(out_view)
    assert out_view.shape == (num_graphs, fp_dim)
    assert bool(jnp.all(out_view == ref))

    # Materialized path: direct HBM->HBM DMA copy via the Pallas kernel.
    out = fp_encoder_forward(x_flat, num_graphs, fp_dim, materialize=True)
    out = jax.block_until_ready(out)
    assert out.shape == (num_graphs, fp_dim)
    assert out.dtype == ref.dtype
    assert bool(jnp.all(out == ref))

    print("KERNEL_OK")
</pallas_src>

<mosaic_0001>
module attributes {stable_mosaic.version = 11 : i64} {
  func.func @kernel(%arg0: memref<8x256xf32, #tpu.memory_space<any>>, %arg1: memref<8x256xf32, #tpu.memory_space<any>>, %arg2: memref<1x!tpu.dma_semaphore, #tpu.memory_space<semaphore_mem>>) attributes {dimension_semantics = [], scalar_prefetch = 0 : i64, scratch_operands = 1 : i64, tpu.core_type = #tpu.core_type<tc>} {
    %c0_i32 = arith.constant 0 : i32
    %c0_i32_0 = arith.constant 0 : i32
    %c0_i32_1 = arith.constant 0 : i32
    %0 = tpu.memref_slice %arg0[%c0_i32_0, %c0_i32_1] : memref<8x256xf32, #tpu.memory_space<any>> -> memref<8x256xf32, #tpu.memory_space<any>>
    %c0_i32_2 = arith.constant 0 : i32
    %c0_i32_3 = arith.constant 0 : i32
    %1 = tpu.memref_slice %arg1[%c0_i32_2, %c0_i32_3] : memref<8x256xf32, #tpu.memory_space<any>> -> memref<8x256xf32, #tpu.memory_space<any>>
    %2 = tpu.memref_slice %arg2[%c0_i32] : memref<1x!tpu.dma_semaphore, #tpu.memory_space<semaphore_mem>> -> memref<1x!tpu.dma_semaphore, #tpu.memory_space<semaphore_mem>>
    %3 = tpu.memref_squeeze %2 : memref<1x!tpu.dma_semaphore, #tpu.memory_space<semaphore_mem>> -> memref<!tpu.dma_semaphore, #tpu.memory_space<semaphore_mem>>
    tpu.enqueue_dma source(%0 : memref<8x256xf32, #tpu.memory_space<any>>) target(%1 : memref<8x256xf32, #tpu.memory_space<any>>) target_semaphore(%3 : memref<!tpu.dma_semaphore, #tpu.memory_space<semaphore_mem>>)
    %c0_i32_4 = arith.constant 0 : i32
    %c0_i32_5 = arith.constant 0 : i32
    %c0_i32_6 = arith.constant 0 : i32
    %4 = tpu.memref_slice %arg0[%c0_i32_5, %c0_i32_6] : memref<8x256xf32, #tpu.memory_space<any>> -> memref<8x256xf32, #tpu.memory_space<any>>
    %c0_i32_7 = arith.constant 0 : i32
    %c0_i32_8 = arith.constant 0 : i32
    %5 = tpu.memref_slice %arg1[%c0_i32_7, %c0_i32_8] : memref<8x256xf32, #tpu.memory_space<any>> -> memref<8x256xf32, #tpu.memory_space<any>>
    %6 = tpu.memref_slice %arg2[%c0_i32_4] : memref<1x!tpu.dma_semaphore, #tpu.memory_space<semaphore_mem>> -> memref<1x!tpu.dma_semaphore, #tpu.memory_space<semaphore_mem>>
    %7 = tpu.memref_squeeze %6 : memref<1x!tpu.dma_semaphore, #tpu.memory_space<semaphore_mem>> -> memref<!tpu.dma_semaphore, #tpu.memory_space<semaphore_mem>>
    tpu.wait_dma2 semaphore(%7 : memref<!tpu.dma_semaphore, #tpu.memory_space<semaphore_mem>>) src(%4 : memref<8x256xf32, #tpu.memory_space<any>>) dst(%5 : memref<8x256xf32, #tpu.memory_space<any>>)
    return
  }
}

</mosaic_0001>

<llo_original>
// kernel: tpu_custom_call.1
$region0: #{tpu_custom_call.1}
  #allocation0 [shape = 'u32[]', space=smem, size = 0x4, offset = 0x4, fixed_abs, tag = 'smem constant byte address 0x4 - core index']
  #allocation1 [shape = 'u32[144,128]{1,0:T(1,128)}', space=vmem, size = 0x12000, scoped, tag = 'internal scratch']
  #allocation2 [shape = 's32[1]{0}', space=sflag, size = 0x4, scoped, tag = 'scratch operand']
  #allocation3 [shape = 's32[]', space=sflag, size = 0x4, offset = 0, fixed_abs, tag = 'sflag constant byte address 0x0 - dummy sync flag']
  #allocation4 [shape = 'u32[0]{0}', space=smem, size = 0, offset = 0, fixed_abs, tag = 'smem constant byte address 0x0 - null']
  %s0 = inlined_call_operand.hbm [shape: f32[8,256], index: 0, kind: input, shape index: {}]
  %s1 = inlined_call_operand.hbm [shape: f32[8,256], index: 1, kind: output, shape index: {}]
  %s2 = sld [smem:[#allocation0]]
  $region2: #{tpu_custom_call.1} parent=0
    _
  %s4 = ssub.s32 1, %s2
  %s5 = scalar_select 0, %s4, %s2
  %s7 = sshll.u32 1, 14
  %s8 = sxor.u32 4294967295, %s7
  %s11 = sshll.u32 3, 24
  %s12 = sxor.u32 4294967295, %s11
  %s13 = sand.u32 0, %s12
  %s15 = sor.u32 %s13, 0
  %18 = dma.general %s0, 256, %s1, [#allocation2], [#allocation3], [#allocation4], %s15, 0
  %s19 = smul.u32 8, 1
  %s20 = smul.u32 %s19, 2
  %s21 = sshll.u32 %s20, 4
  %22 = dma.done [#allocation2], %s21
  %23 = vsyncmov [#allocation2]
  %s24 = vpop.sfrf %23
  %p25 = scmp.eq.s32.totalorder %s24, 0
  %p26 = pneg %p25
  %28 = shalt.err (%p26)

</llo_original>
